<compile_context>
chip_gen: v7x
topology: tpu7x:2x2x1
jax: 0.10.0
libtpu: 0.0.40
codegen_flags: <defaults>
</compile_context>

<pallas_src>
import functools

import numpy as np
import jax
import jax.numpy as jnp
from jax.experimental import pallas as pl
from jax.experimental.pallas import tpu as pltpu


def _cdiv(a, b):
    return -(-a // b)


# ---------------------------------------------------------------------------
# VMEM budgeting (conservative across v5e / v6e / v7x)
# ---------------------------------------------------------------------------
_VMEM_WORKING_BUDGET = 24 << 20   # double-buffered in+out block working set
_VMEM_LIMIT_BYTES = 48 << 20      # scoped VMEM limit (> v5e 16MiB default, < v7x 64MiB physical)
_ROW_ALIGN = 32                   # covers (32,128) int8/uint8 tiling and (8,128) f32 tiling


def _pick_tile_rows(H, bytes_per_row, align=_ROW_ALIGN, min_steps=2):
    """Rows per block: as large as the double-buffered VMEM budget allows, a multiple
    of `align` (or the full H), clamped so large frames keep >= min_steps grid steps
    (both v7x TensorCores get work). Ragged last blocks are fine: Pallas drops the
    out-of-bounds rows on writeback."""
    th = _VMEM_WORKING_BUDGET // (2 * max(bytes_per_row, 1))
    th = max(align, (th // align) * align)
    if H >= min_steps * align:
        th = min(th, max(align, (_cdiv(H, min_steps) // align) * align))
    return min(th, H)


def _mosaic_params():
    return pltpu.CompilerParams(dimension_semantics=("parallel",),
                                vmem_limit_bytes=_VMEM_LIMIT_BYTES)


def _recip(x):
    """Near-exact reciprocal: EUP approx vrcp (free bundle slot) + one Newton step."""
    r = pl.reciprocal(x, approx=True)
    return r * (2.0 - x * r)


# ImageNet normalization used by XMem's `norm` (torchvision im_normalization).
_IM_MEAN = np.array([0.485, 0.456, 0.406], dtype=np.float32)
_IM_STD = np.array([0.229, 0.224, 0.225], dtype=np.float32)
# fused constants: (x/255 - mean)/std == x * scale + bias
_PRE_SCALE = (1.0 / (255.0 * _IM_STD)).astype(np.float32)
_PRE_BIAS = (-_IM_MEAN / _IM_STD).astype(np.float32)


# ----------------------------------------------------------------------------
# Kernel 1: image preprocessing
#   out[c] = raw[c] * scale_c + bias_c   (cast-to-f32 + per-channel FMA),
#   with the %16 centered-pad border zero-filled in-kernel.
# ----------------------------------------------------------------------------
def _preprocess_kernel(img_ref, out_ref, *, th, H, W, lh, lw, padded):
    if padded:
        shp = (img_ref.shape[1], img_ref.shape[2])
        rows = pl.program_id(0) * th + jax.lax.broadcasted_iota(jnp.int32, shp, 0)
        cols = jax.lax.broadcasted_iota(jnp.int32, shp, 1)
        inb = (rows >= lh) & (rows < lh + H) & (cols >= lw) & (cols < lw + W)
    for c in range(3):
        x = img_ref[c]
        if not jnp.issubdtype(x.dtype, jnp.floating):
            x = x.astype(jnp.int32)          # uint8 raw image path
        y = x.astype(jnp.float32) * float(_PRE_SCALE[c]) + float(_PRE_BIAS[c])
        out_ref[c] = jnp.where(inb, y, 0.0) if padded else y


def preprocess_image(image_hwc):
    """XMem._preprocess_image for a raw (H, W, 3) image (uint8 or float in [0,255]).

    Returns (image (1, 3, Hp, Wp) float32, pad) with Hp, Wp multiples of 16 and the
    pad border zero-filled (== F.pad of the normalized image).
    """
    # TODO(synk): the already-normalized torch.Tensor input path (pad_divide_by only)
    # is not replicated here.
    H, W, C = image_hwc.shape
    assert C == 3
    d = 16
    Hp = H if H % d == 0 else H + d - H % d
    Wp = W if W % d == 0 else W + d - W % d
    lh, uh = (Hp - H) // 2, (Hp - H) - (Hp - H) // 2
    lw, uw = (Wp - W) // 2, (Wp - W) - (Wp - W) // 2
    pad = (lw, uw, lh, uh)

    # HWC->CHW transpose + %16 centered pad on the NARROW raw dtype (1 byte/elem for
    # raw uint8 frames); fuses into one cheap XLA pass. The f32 cast happens in-kernel.
    raw = jnp.transpose(image_hwc, (2, 0, 1))
    if any(pad):
        raw = jnp.pad(raw, ((0, 0), (lh, uh), (lw, uw)))

    in_bytes = jnp.dtype(image_hwc.dtype).itemsize
    bytes_per_row = Wp * 3 * (in_bytes + 4)
    th = _pick_tile_rows(Hp, bytes_per_row)

    kernel = functools.partial(_preprocess_kernel, th=th, H=H, W=W, lh=lh, lw=lw,
                               padded=bool(any(pad)))
    out = pl.pallas_call(
        kernel,
        out_shape=jax.ShapeDtypeStruct((3, Hp, Wp), jnp.float32),
        grid=(_cdiv(Hp, th),),
        in_specs=[pl.BlockSpec((3, th, Wp), lambda i: (0, i, 0))],
        out_specs=pl.BlockSpec((3, th, Wp), lambda i: (0, i, 0)),
        compiler_params=_mosaic_params(),
    )(raw)
    return out[None], pad  # (1, 3, Hp, Wp), pad


def unpad(x, pad):
    lw, uw, lh, uh = pad
    H, W = x.shape[-2], x.shape[-1]
    return x[..., lh:H - uh if uh else H, lw:W - uw if uw else W]


# ----------------------------------------------------------------------------
# Kernel 2: aggregate (soft-aggregation over [bg; objects], via odds
#           normalization) fused with binarize (first-max argmax == object ids).
# ----------------------------------------------------------------------------
def _finalize_binarize_kernel(mask_ref, prob_ref, bin_ref):
    M = mask_ref.shape[0]
    eps = 1e-7

    # Pass 1: background prob = prod_i (1 - m_i) and per-object odds.
    # aggregate() == softmax(log(p/(1-p))) over channels == odds normalization
    # (no log/exp); odds are stashed in the prob output block (VMEM) to avoid
    # holding M large intermediates live.
    bg = None
    total_fg = None
    for i in range(M):
        om = 1.0 - mask_ref[i]                       # (th, W) raw 1 - m_i
        bg = om if bg is None else bg * om
        om_c = jnp.clip(om, eps, 1.0 - eps)          # clipped (1 - m_i)
        odds_i = (1.0 - om_c) * _recip(om_c)         # m_c / (1 - m_c)
        prob_ref[i + 1] = odds_i                     # stash odds (rescaled in pass 2)
        total_fg = odds_i if total_fg is None else total_fg + odds_i

    bg_c = jnp.clip(bg, eps, 1.0 - eps)
    odds_bg = bg_c * _recip(1.0 - bg_c)
    inv_total = _recip(odds_bg + total_fg)
    prob_ref[0] = odds_bg * inv_total

    # Pass 2: normalize odds -> prob, running first-max-wins argmax over channels
    # [bg, fg_1..fg_M] (odds are a monotone transform of the probabilities).
    best = odds_bg
    am = jnp.zeros(best.shape, jnp.int32)            # channel 0 = background
    for i in range(M):
        odds_i = prob_ref[i + 1]
        prob_ref[i + 1] = odds_i * inv_total
        better = odds_i > best
        best = jnp.where(better, odds_i, best)
        am = jnp.where(better, jnp.int32(i + 1), am)

    # Pass 3: per-object binary masks (object i wins channel i+1); int8 output.
    for i in range(M):
        bin_ref[i] = (am == (i + 1)).astype(jnp.int8)


def finalize_and_binarize(mask_mhw):
    """mask_mhw: (M, H, W) float32 object probabilities.

    Returns:
      pred_prob_with_bg: (M+1, H, W) float32 -- aggregate(mask, dim=0)
      pred_mask_bin:     (M, H, W)   int8    -- per-object argmax binary masks (0/1)
    """
    # TODO(synk): prob could be emitted as bfloat16 if the downstream value encoder
    # tolerates it (halves the largest output stream); kept float32 here.
    M, H, W = mask_mhw.shape
    if M == 0:
        return jnp.ones((1, H, W), jnp.float32), jnp.zeros((0, H, W), jnp.int8)

    mask = mask_mhw.astype(jnp.float32)
    bytes_per_row = W * (4 * M + 4 * (M + 1) + 1 * M)   # in f32 + prob f32 + bin int8
    th = _pick_tile_rows(H, bytes_per_row)

    prob, binm = pl.pallas_call(
        _finalize_binarize_kernel,
        out_shape=(
            jax.ShapeDtypeStruct((M + 1, H, W), jnp.float32),
            jax.ShapeDtypeStruct((M, H, W), jnp.int8),
        ),
        grid=(_cdiv(H, th),),
        in_specs=[pl.BlockSpec((M, th, W), lambda i: (0, i, 0))],
        out_specs=(
            pl.BlockSpec((M + 1, th, W), lambda i: (0, i, 0)),
            pl.BlockSpec((M, th, W), lambda i: (0, i, 0)),
        ),
        compiler_params=_mosaic_params(),
    )(mask)
    return prob, binm


# ----------------------------------------------------------------------------
# XMem.forward (first-frame path: detection mask given, empty memory)
# ----------------------------------------------------------------------------
def xmem_forward_first_frame(image_hwc, mask_mhw, binarize_mask=True):
    """Mirrors XMem.forward semantics for the first frame with a provided mask:
    memory is empty -> need_segment=False -> pred_prob = aggregate(mask);
    track ids are assigned 0..M-1; binarize drops absent objects."""
    image, pad = preprocess_image(image_hwc)
    # TODO(synk): model.encode_key / memory.match_memory / model.segment /
    # model.encode_value / MemoryManager bookkeeping / Hungarian mask assignment /
    # cv2.dilate depend on external XMemModel weights + MemoryManager and are not
    # translated here.
    M = mask_mhw.shape[0]
    # NOTE: the %16 pad applied to the mask is undone by unpad() right after
    # aggregate() in the torch forward; skip the pad/unpad HBM round-trip.
    pred_prob_with_bg, pred_bin = finalize_and_binarize(mask_mhw)
    track_ids = np.arange(M)
    input_track_ids = np.arange(M)
    if not binarize_mask:
        return pred_prob_with_bg, track_ids, input_track_ids
    # _binarize_mask: drop objects with empty masks (dynamic shape -> host numpy glue)
    pred_bin_np = np.asarray(pred_bin).astype(bool)
    present = pred_bin_np.any(axis=(1, 2))
    return pred_bin_np[present], track_ids[present], input_track_ids


# ----------------------------------------------------------------------------
if __name__ == "__main__":
    key = jax.random.PRNGKey(0)

    def reference(image_f32_hwc, mask_np):
        m = mask_np.astype(np.float32)
        bg = np.prod(1.0 - m, axis=0, keepdims=True)
        p = np.clip(np.concatenate([bg, m], axis=0), 1e-7, 1 - 1e-7)
        logits = np.log(p / (1.0 - p))
        e = np.exp(logits - logits.max(axis=0, keepdims=True))
        ref_prob = e / e.sum(axis=0, keepdims=True)
        ref_am = np.argmax(ref_prob, axis=0) - 1
        ref_bin = (np.arange(m.shape[0])[:, None, None] == ref_am[None])
        ref_img = (image_f32_hwc.transpose(2, 0, 1) / 255.0
                   - _IM_MEAN[:, None, None]) / _IM_STD[:, None, None]
        return ref_prob, ref_bin, ref_img

    # small f32 case (single grid step, tiny dims) + a larger non-%16 uint8 raw-image
    # case (multi-step grid, ragged last block, in-kernel zero pad).
    cases = [((16, 16, 4), False), ((136, 248, 5), True)]
    for (H, W, M), as_uint8 in cases:
        k_img, k_mask, key = jax.random.split(key, 3)
        image = jax.random.uniform(k_img, (H, W, 3), jnp.float32) * 255.0
        if as_uint8:
            image = image.astype(jnp.uint8)
        mask = jax.nn.sigmoid(jax.random.normal(k_mask, (M, H, W), jnp.float32) * 3.0)

        prob, binm = finalize_and_binarize(mask)
        img_pre, pad = preprocess_image(image)
        jax.block_until_ready((prob, binm, img_pre))

        ref_prob, ref_bin, ref_img = reference(np.asarray(image).astype(np.float32),
                                               np.asarray(mask))
        assert img_pre.shape[-2] % 16 == 0 and img_pre.shape[-1] % 16 == 0
        np.testing.assert_allclose(np.asarray(prob), ref_prob, atol=5e-5)
        assert np.array_equal(np.asarray(binm).astype(bool), ref_bin)
        img_pre_np = np.asarray(img_pre)[0]
        np.testing.assert_allclose(np.asarray(unpad(img_pre, pad))[0], ref_img, atol=1e-5)
        if any(pad):  # pad border of the normalized image must be exactly zero
            lw, uw, lh, uh = pad
            assert np.all(img_pre_np[:, :lh, :] == 0.0)
            assert np.all(img_pre_np[:, :, :lw] == 0.0)
            assert np.all(img_pre_np[:, img_pre_np.shape[1] - uh:, :] == 0.0)
            assert np.all(img_pre_np[:, :, img_pre_np.shape[2] - uw:] == 0.0)

    # full first-frame forward path (incl. host-side numpy glue for dynamic filtering)
    pm, tids, itids = xmem_forward_first_frame(image, mask)
    assert pm.shape[1:] == (H, W)
    print("KERNEL_OK")
</pallas_src>

<mosaic_0001>
module attributes {stable_mosaic.version = 11 : i64} {
  func.func @_finalize_binarize_kernel(%arg0: i32, %arg1: memref<4x16x16xf32, #tpu.memory_space<vmem>>, %arg2: memref<5x16x16xf32, #tpu.memory_space<vmem>>, %arg3: memref<4x16x16xi8, #tpu.memory_space<vmem>>) attributes {dimension_semantics = [#tpu.dimension_semantics<parallel>], iteration_bounds = array<i64: 1>, scalar_prefetch = 0 : i64, scratch_operands = 0 : i64, tpu.core_type = #tpu.core_type<tc>, window_params = [{transform_indices = @transform_0, window_bounds = array<i64: 4, 16, 16>}, {transform_indices = @transform_1, window_bounds = array<i64: 5, 16, 16>}, {transform_indices = @transform_2, window_bounds = array<i64: 4, 16, 16>}]} {
    %c0 = arith.constant 0 : index
    %c0_0 = arith.constant 0 : index
    %c0_1 = arith.constant 0 : index
    %0 = vector.load %arg1[%c0, %c0_0, %c0_1] : memref<4x16x16xf32, #tpu.memory_space<vmem>>, vector<1x16x16xf32>
    %1 = vector.shape_cast %0 : vector<1x16x16xf32> to vector<16x16xf32>
    %cst = arith.constant 1.000000e+00 : f32
    %2 = vector.broadcast %cst : f32 to vector<16x16xf32>
    %3 = arith.subf %2, %1 : vector<16x16xf32>
    %cst_2 = arith.constant 1.000000e-07 : f32
    %cst_3 = arith.constant 0.99999988 : f32
    %4 = vector.broadcast %cst_2 : f32 to vector<16x16xf32>
    %5 = arith.maximumf %4, %3 : vector<16x16xf32>
    %6 = vector.broadcast %cst_3 : f32 to vector<16x16xf32>
    %7 = arith.minimumf %6, %5 : vector<16x16xf32>
    %cst_4 = arith.constant 1.000000e+00 : f32
    %8 = vector.broadcast %cst_4 : f32 to vector<16x16xf32>
    %9 = arith.subf %8, %7 : vector<16x16xf32>
    %10 = tpu.reciprocal %7 {approx = true} : vector<16x16xf32> -> vector<16x16xf32>
    %11 = arith.mulf %7, %10 : vector<16x16xf32>
    %cst_5 = arith.constant 2.000000e+00 : f32
    %12 = vector.broadcast %cst_5 : f32 to vector<16x16xf32>
    %13 = arith.subf %12, %11 : vector<16x16xf32>
    %14 = arith.mulf %10, %13 : vector<16x16xf32>
    %15 = arith.mulf %9, %14 : vector<16x16xf32>
    %c1 = arith.constant 1 : index
    %c0_6 = arith.constant 0 : index
    %c0_7 = arith.constant 0 : index
    %16 = vector.load %arg2[%c1, %c0_6, %c0_7] : memref<5x16x16xf32, #tpu.memory_space<vmem>>, vector<1x16x16xf32>
    %17 = vector.shape_cast %16 : vector<1x16x16xf32> to vector<16x16xf32>
    %18 = vector.shape_cast %15 : vector<16x16xf32> to vector<1x16x16xf32>
    tpu.vector_store %arg2[%c1, %c0_6, %c0_7], %18 {strides = array<i32>} : memref<5x16x16xf32, #tpu.memory_space<vmem>>, vector<1x16x16xf32>,
    %c1_8 = arith.constant 1 : index
    %c0_9 = arith.constant 0 : index
    %c0_10 = arith.constant 0 : index
    %19 = vector.load %arg1[%c1_8, %c0_9, %c0_10] : memref<4x16x16xf32, #tpu.memory_space<vmem>>, vector<1x16x16xf32>
    %20 = vector.shape_cast %19 : vector<1x16x16xf32> to vector<16x16xf32>
    %cst_11 = arith.constant 1.000000e+00 : f32
    %21 = vector.broadcast %cst_11 : f32 to vector<16x16xf32>
    %22 = arith.subf %21, %20 : vector<16x16xf32>
    %23 = arith.mulf %3, %22 : vector<16x16xf32>
    %cst_12 = arith.constant 1.000000e-07 : f32
    %cst_13 = arith.constant 0.99999988 : f32
    %24 = vector.broadcast %cst_12 : f32 to vector<16x16xf32>
    %25 = arith.maximumf %24, %22 : vector<16x16xf32>
    %26 = vector.broadcast %cst_13 : f32 to vector<16x16xf32>
    %27 = arith.minimumf %26, %25 : vector<16x16xf32>
    %cst_14 = arith.constant 1.000000e+00 : f32
    %28 = vector.broadcast %cst_14 : f32 to vector<16x16xf32>
    %29 = arith.subf %28, %27 : vector<16x16xf32>
    %30 = tpu.reciprocal %27 {approx = true} : vector<16x16xf32> -> vector<16x16xf32>
    %31 = arith.mulf %27, %30 : vector<16x16xf32>
    %cst_15 = arith.constant 2.000000e+00 : f32
    %32 = vector.broadcast %cst_15 : f32 to vector<16x16xf32>
    %33 = arith.subf %32, %31 : vector<16x16xf32>
    %34 = arith.mulf %30, %33 : vector<16x16xf32>
    %35 = arith.mulf %29, %34 : vector<16x16xf32>
    %c2 = arith.constant 2 : index
    %c0_16 = arith.constant 0 : index
    %c0_17 = arith.constant 0 : index
    %36 = vector.load %arg2[%c2, %c0_16, %c0_17] : memref<5x16x16xf32, #tpu.memory_space<vmem>>, vector<1x16x16xf32>
    %37 = vector.shape_cast %36 : vector<1x16x16xf32> to vector<16x16xf32>
    %38 = vector.shape_cast %35 : vector<16x16xf32> to vector<1x16x16xf32>
    tpu.vector_store %arg2[%c2, %c0_16, %c0_17], %38 {strides = array<i32>} : memref<5x16x16xf32, #tpu.memory_space<vmem>>, vector<1x16x16xf32>,
    %39 = arith.addf %15, %35 : vector<16x16xf32>
    %c2_18 = arith.constant 2 : index
    %c0_19 = arith.constant 0 : index
    %c0_20 = arith.constant 0 : index
    %40 = vector.load %arg1[%c2_18, %c0_19, %c0_20] : memref<4x16x16xf32, #tpu.memory_space<vmem>>, vector<1x16x16xf32>
    %41 = vector.shape_cast %40 : vector<1x16x16xf32> to vector<16x16xf32>
    %cst_21 = arith.constant 1.000000e+00 : f32
    %42 = vector.broadcast %cst_21 : f32 to vector<16x16xf32>
    %43 = arith.subf %42, %41 : vector<16x16xf32>
    %44 = arith.mulf %23, %43 : vector<16x16xf32>
    %cst_22 = arith.constant 1.000000e-07 : f32
    %cst_23 = arith.constant 0.99999988 : f32
    %45 = vector.broadcast %cst_22 : f32 to vector<16x16xf32>
    %46 = arith.maximumf %45, %43 : vector<16x16xf32>
    %47 = vector.broadcast %cst_23 : f32 to vector<16x16xf32>
    %48 = arith.minimumf %47, %46 : vector<16x16xf32>
    %cst_24 = arith.constant 1.000000e+00 : f32
    %49 = vector.broadcast %cst_24 : f32 to vector<16x16xf32>
    %50 = arith.subf %49, %48 : vector<16x16xf32>
    %51 = tpu.reciprocal %48 {approx = true} : vector<16x16xf32> -> vector<16x16xf32>
    %52 = arith.mulf %48, %51 : vector<16x16xf32>
    %cst_25 = arith.constant 2.000000e+00 : f32
    %53 = vector.broadcast %cst_25 : f32 to vector<16x16xf32>
    %54 = arith.subf %53, %52 : vector<16x16xf32>
    %55 = arith.mulf %51, %54 : vector<16x16xf32>
    %56 = arith.mulf %50, %55 : vector<16x16xf32>
    %c3 = arith.constant 3 : index
    %c0_26 = arith.constant 0 : index
    %c0_27 = arith.constant 0 : index
    %57 = vector.load %arg2[%c3, %c0_26, %c0_27] : memref<5x16x16xf32, #tpu.memory_space<vmem>>, vector<1x16x16xf32>
    %58 = vector.shape_cast %57 : vector<1x16x16xf32> to vector<16x16xf32>
    %59 = vector.shape_cast %56 : vector<16x16xf32> to vector<1x16x16xf32>
    tpu.vector_store %arg2[%c3, %c0_26, %c0_27], %59 {strides = array<i32>} : memref<5x16x16xf32, #tpu.memory_space<vmem>>, vector<1x16x16xf32>,
    %60 = arith.addf %39, %56 : vector<16x16xf32>
    %c3_28 = arith.constant 3 : index
    %c0_29 = arith.constant 0 : index
    %c0_30 = arith.constant 0 : index
    %61 = vector.load %arg1[%c3_28, %c0_29, %c0_30] : memref<4x16x16xf32, #tpu.memory_space<vmem>>, vector<1x16x16xf32>
    %62 = vector.shape_cast %61 : vector<1x16x16xf32> to vector<16x16xf32>
    %cst_31 = arith.constant 1.000000e+00 : f32
    %63 = vector.broadcast %cst_31 : f32 to vector<16x16xf32>
    %64 = arith.subf %63, %62 : vector<16x16xf32>
    %65 = arith.mulf %44, %64 : vector<16x16xf32>
    %cst_32 = arith.constant 1.000000e-07 : f32
    %cst_33 = arith.constant 0.99999988 : f32
    %66 = vector.broadcast %cst_32 : f32 to vector<16x16xf32>
    %67 = arith.maximumf %66, %64 : vector<16x16xf32>
    %68 = vector.broadcast %cst_33 : f32 to vector<16x16xf32>
    %69 = arith.minimumf %68, %67 : vector<16x16xf32>
    %cst_34 = arith.constant 1.000000e+00 : f32
    %70 = vector.broadcast %cst_34 : f32 to vector<16x16xf32>
    %71 = arith.subf %70, %69 : vector<16x16xf32>
    %72 = tpu.reciprocal %69 {approx = true} : vector<16x16xf32> -> vector<16x16xf32>
    %73 = arith.mulf %69, %72 : vector<16x16xf32>
    %cst_35 = arith.constant 2.000000e+00 : f32
    %74 = vector.broadcast %cst_35 : f32 to vector<16x16xf32>
    %75 = arith.subf %74, %73 : vector<16x16xf32>
    %76 = arith.mulf %72, %75 : vector<16x16xf32>
    %77 = arith.mulf %71, %76 : vector<16x16xf32>
    %c4 = arith.constant 4 : index
    %c0_36 = arith.constant 0 : index
    %c0_37 = arith.constant 0 : index
    %78 = vector.load %arg2[%c4, %c0_36, %c0_37] : memref<5x16x16xf32, #tpu.memory_space<vmem>>, vector<1x16x16xf32>
    %79 = vector.shape_cast %78 : vector<1x16x16xf32> to vector<16x16xf32>
    %80 = vector.shape_cast %77 : vector<16x16xf32> to vector<1x16x16xf32>
    tpu.vector_store %arg2[%c4, %c0_36, %c0_37], %80 {strides = array<i32>} : memref<5x16x16xf32, #tpu.memory_space<vmem>>, vector<1x16x16xf32>,
    %81 = arith.addf %60, %77 : vector<16x16xf32>
    %cst_38 = arith.constant 1.000000e-07 : f32
    %cst_39 = arith.constant 0.99999988 : f32
    %82 = vector.broadcast %cst_38 : f32 to vector<16x16xf32>
    %83 = arith.maximumf %82, %65 : vector<16x16xf32>
    %84 = vector.broadcast %cst_39 : f32 to vector<16x16xf32>
    %85 = arith.minimumf %84, %83 : vector<16x16xf32>
    %cst_40 = arith.constant 1.000000e+00 : f32
    %86 = vector.broadcast %cst_40 : f32 to vector<16x16xf32>
    %87 = arith.subf %86, %85 : vector<16x16xf32>
    %88 = tpu.reciprocal %87 {approx = true} : vector<16x16xf32> -> vector<16x16xf32>
    %89 = arith.mulf %87, %88 : vector<16x16xf32>
    %cst_41 = arith.constant 2.000000e+00 : f32
    %90 = vector.broadcast %cst_41 : f32 to vector<16x16xf32>
    %91 = arith.subf %90, %89 : vector<16x16xf32>
    %92 = arith.mulf %88, %91 : vector<16x16xf32>
    %93 = arith.mulf %85, %92 : vector<16x16xf32>
    %94 = arith.addf %93, %81 : vector<16x16xf32>
    %95 = tpu.reciprocal %94 {approx = true} : vector<16x16xf32> -> vector<16x16xf32>
    %96 = arith.mulf %94, %95 : vector<16x16xf32>
    %cst_42 = arith.constant 2.000000e+00 : f32
    %97 = vector.broadcast %cst_42 : f32 to vector<16x16xf32>
    %98 = arith.subf %97, %96 : vector<16x16xf32>
    %99 = arith.mulf %95, %98 : vector<16x16xf32>
    %100 = arith.mulf %93, %99 : vector<16x16xf32>
    %c0_43 = arith.constant 0 : index
    %c0_44 = arith.constant 0 : index
    %c0_45 = arith.constant 0 : index
    %101 = vector.load %arg2[%c0_43, %c0_44, %c0_45] : memref<5x16x16xf32, #tpu.memory_space<vmem>>, vector<1x16x16xf32>
    %102 = vector.shape_cast %101 : vector<1x16x16xf32> to vector<16x16xf32>
    %103 = vector.shape_cast %100 : vector<16x16xf32> to vector<1x16x16xf32>
    tpu.vector_store %arg2[%c0_43, %c0_44, %c0_45], %103 {strides = array<i32>} : memref<5x16x16xf32, #tpu.memory_space<vmem>>, vector<1x16x16xf32>,
    %c0_i32 = arith.constant 0 : i32
    %104 = vector.broadcast %c0_i32 : i32 to vector<16x16xi32>
    %c1_46 = arith.constant 1 : index
    %c0_47 = arith.constant 0 : index
    %c0_48 = arith.constant 0 : index
    %105 = vector.load %arg2[%c1_46, %c0_47, %c0_48] : memref<5x16x16xf32, #tpu.memory_space<vmem>>, vector<1x16x16xf32>
    %106 = vector.shape_cast %105 : vector<1x16x16xf32> to vector<16x16xf32>
    %107 = arith.mulf %106, %99 : vector<16x16xf32>
    %c1_49 = arith.constant 1 : index
    %c0_50 = arith.constant 0 : index
    %c0_51 = arith.constant 0 : index
    %108 = vector.load %arg2[%c1_49, %c0_50, %c0_51] : memref<5x16x16xf32, #tpu.memory_space<vmem>>, vector<1x16x16xf32>
    %109 = vector.shape_cast %108 : vector<1x16x16xf32> to vector<16x16xf32>
    %110 = vector.shape_cast %107 : vector<16x16xf32> to vector<1x16x16xf32>
    tpu.vector_store %arg2[%c1_49, %c0_50, %c0_51], %110 {strides = array<i32>} : memref<5x16x16xf32, #tpu.memory_space<vmem>>, vector<1x16x16xf32>,
    %111 = arith.cmpf ogt, %106, %93 : vector<16x16xf32>
    %112 = arith.select %111, %106, %93 : vector<16x16xi1>, vector<16x16xf32>
    %c1_i32 = arith.constant 1 : i32
    %113 = vector.broadcast %c1_i32 : i32 to vector<16x16xi32>
    %114 = arith.select %111, %113, %104 : vector<16x16xi1>, vector<16x16xi32>
    %c2_52 = arith.constant 2 : index
    %c0_53 = arith.constant 0 : index
    %c0_54 = arith.constant 0 : index
    %115 = vector.load %arg2[%c2_52, %c0_53, %c0_54] : memref<5x16x16xf32, #tpu.memory_space<vmem>>, vector<1x16x16xf32>
    %116 = vector.shape_cast %115 : vector<1x16x16xf32> to vector<16x16xf32>
    %117 = arith.mulf %116, %99 : vector<16x16xf32>
    %c2_55 = arith.constant 2 : index
    %c0_56 = arith.constant 0 : index
    %c0_57 = arith.constant 0 : index
    %118 = vector.load %arg2[%c2_55, %c0_56, %c0_57] : memref<5x16x16xf32, #tpu.memory_space<vmem>>, vector<1x16x16xf32>
    %119 = vector.shape_cast %118 : vector<1x16x16xf32> to vector<16x16xf32>
    %120 = vector.shape_cast %117 : vector<16x16xf32> to vector<1x16x16xf32>
    tpu.vector_store %arg2[%c2_55, %c0_56, %c0_57], %120 {strides = array<i32>} : memref<5x16x16xf32, #tpu.memory_space<vmem>>, vector<1x16x16xf32>,
    %121 = arith.cmpf ogt, %116, %112 : vector<16x16xf32>
    %122 = arith.select %121, %116, %112 : vector<16x16xi1>, vector<16x16xf32>
    %c2_i32 = arith.constant 2 : i32
    %123 = vector.broadcast %c2_i32 : i32 to vector<16x16xi32>
    %124 = arith.select %121, %123, %114 : vector<16x16xi1>, vector<16x16xi32>
    %c3_58 = arith.constant 3 : index
    %c0_59 = arith.constant 0 : index
    %c0_60 = arith.constant 0 : index
    %125 = vector.load %arg2[%c3_58, %c0_59, %c0_60] : memref<5x16x16xf32, #tpu.memory_space<vmem>>, vector<1x16x16xf32>
    %126 = vector.shape_cast %125 : vector<1x16x16xf32> to vector<16x16xf32>
    %127 = arith.mulf %126, %99 : vector<16x16xf32>
    %c3_61 = arith.constant 3 : index
    %c0_62 = arith.constant 0 : index
    %c0_63 = arith.constant 0 : index
    %128 = vector.load %arg2[%c3_61, %c0_62, %c0_63] : memref<5x16x16xf32, #tpu.memory_space<vmem>>, vector<1x16x16xf32>
    %129 = vector.shape_cast %128 : vector<1x16x16xf32> to vector<16x16xf32>
    %130 = vector.shape_cast %127 : vector<16x16xf32> to vector<1x16x16xf32>
    tpu.vector_store %arg2[%c3_61, %c0_62, %c0_63], %130 {strides = array<i32>} : memref<5x16x16xf32, #tpu.memory_space<vmem>>, vector<1x16x16xf32>,
    %131 = arith.cmpf ogt, %126, %122 : vector<16x16xf32>
    %132 = arith.select %131, %126, %122 : vector<16x16xi1>, vector<16x16xf32>
    %c3_i32 = arith.constant 3 : i32
    %133 = vector.broadcast %c3_i32 : i32 to vector<16x16xi32>
    %134 = arith.select %131, %133, %124 : vector<16x16xi1>, vector<16x16xi32>
    %c4_64 = arith.constant 4 : index
    %c0_65 = arith.constant 0 : index
    %c0_66 = arith.constant 0 : index
    %135 = vector.load %arg2[%c4_64, %c0_65, %c0_66] : memref<5x16x16xf32, #tpu.memory_space<vmem>>, vector<1x16x16xf32>
    %136 = vector.shape_cast %135 : vector<1x16x16xf32> to vector<16x16xf32>
    %137 = arith.mulf %136, %99 : vector<16x16xf32>
    %c4_67 = arith.constant 4 : index
    %c0_68 = arith.constant 0 : index
    %c0_69 = arith.constant 0 : index
    %138 = vector.load %arg2[%c4_67, %c0_68, %c0_69] : memref<5x16x16xf32, #tpu.memory_space<vmem>>, vector<1x16x16xf32>
    %139 = vector.shape_cast %138 : vector<1x16x16xf32> to vector<16x16xf32>
    %140 = vector.shape_cast %137 : vector<16x16xf32> to vector<1x16x16xf32>
    tpu.vector_store %arg2[%c4_67, %c0_68, %c0_69], %140 {strides = array<i32>} : memref<5x16x16xf32, #tpu.memory_space<vmem>>, vector<1x16x16xf32>,
    %141 = arith.cmpf ogt, %136, %132 : vector<16x16xf32>
    %c4_i32 = arith.constant 4 : i32
    %142 = vector.broadcast %c4_i32 : i32 to vector<16x16xi32>
    %143 = arith.select %141, %142, %134 : vector<16x16xi1>, vector<16x16xi32>
    %c1_i32_70 = arith.constant 1 : i32
    %144 = vector.broadcast %c1_i32_70 : i32 to vector<16x16xi32>
    %145 = arith.cmpi eq, %143, %144 : vector<16x16xi32>
    %146 = arith.extui %145 : vector<16x16xi1> to vector<16x16xi8>
    %c0_71 = arith.constant 0 : index
    %c0_72 = arith.constant 0 : index
    %c0_73 = arith.constant 0 : index
    %147 = vector.load %arg3[%c0_71, %c0_72, %c0_73] : memref<4x16x16xi8, #tpu.memory_space<vmem>>, vector<1x16x16xi8>
    %148 = vector.shape_cast %147 : vector<1x16x16xi8> to vector<16x16xi8>
    %149 = vector.shape_cast %146 : vector<16x16xi8> to vector<1x16x16xi8>
    tpu.vector_store %arg3[%c0_71, %c0_72, %c0_73], %149 {strides = array<i32>} : memref<4x16x16xi8, #tpu.memory_space<vmem>>, vector<1x16x16xi8>,
    %c2_i32_74 = arith.constant 2 : i32
    %150 = vector.broadcast %c2_i32_74 : i32 to vector<16x16xi32>
    %151 = arith.cmpi eq, %143, %150 : vector<16x16xi32>
    %152 = arith.extui %151 : vector<16x16xi1> to vector<16x16xi8>
    %c1_75 = arith.constant 1 : index
    %c0_76 = arith.constant 0 : index
    %c0_77 = arith.constant 0 : index
    %153 = vector.load %arg3[%c1_75, %c0_76, %c0_77] : memref<4x16x16xi8, #tpu.memory_space<vmem>>, vector<1x16x16xi8>
    %154 = vector.shape_cast %153 : vector<1x16x16xi8> to vector<16x16xi8>
    %155 = vector.shape_cast %152 : vector<16x16xi8> to vector<1x16x16xi8>
    tpu.vector_store %arg3[%c1_75, %c0_76, %c0_77], %155 {strides = array<i32>} : memref<4x16x16xi8, #tpu.memory_space<vmem>>, vector<1x16x16xi8>,
    %c3_i32_78 = arith.constant 3 : i32
    %156 = vector.broadcast %c3_i32_78 : i32 to vector<16x16xi32>
    %157 = arith.cmpi eq, %143, %156 : vector<16x16xi32>
    %158 = arith.extui %157 : vector<16x16xi1> to vector<16x16xi8>
    %c2_79 = arith.constant 2 : index
    %c0_80 = arith.constant 0 : index
    %c0_81 = arith.constant 0 : index
    %159 = vector.load %arg3[%c2_79, %c0_80, %c0_81] : memref<4x16x16xi8, #tpu.memory_space<vmem>>, vector<1x16x16xi8>
    %160 = vector.shape_cast %159 : vector<1x16x16xi8> to vector<16x16xi8>
    %161 = vector.shape_cast %158 : vector<16x16xi8> to vector<1x16x16xi8>
    tpu.vector_store %arg3[%c2_79, %c0_80, %c0_81], %161 {strides = array<i32>} : memref<4x16x16xi8, #tpu.memory_space<vmem>>, vector<1x16x16xi8>,
    %c4_i32_82 = arith.constant 4 : i32
    %162 = vector.broadcast %c4_i32_82 : i32 to vector<16x16xi32>
    %163 = arith.cmpi eq, %143, %162 : vector<16x16xi32>
    %164 = arith.extui %163 : vector<16x16xi1> to vector<16x16xi8>
    %c3_83 = arith.constant 3 : index
    %c0_84 = arith.constant 0 : index
    %c0_85 = arith.constant 0 : index
    %165 = vector.load %arg3[%c3_83, %c0_84, %c0_85] : memref<4x16x16xi8, #tpu.memory_space<vmem>>, vector<1x16x16xi8>
    %166 = vector.shape_cast %165 : vector<1x16x16xi8> to vector<16x16xi8>
    %167 = vector.shape_cast %164 : vector<16x16xi8> to vector<1x16x16xi8>
    tpu.vector_store %arg3[%c3_83, %c0_84, %c0_85], %167 {strides = array<i32>} : memref<4x16x16xi8, #tpu.memory_space<vmem>>, vector<1x16x16xi8>,
    return
  }
  func.func @transform_0(%arg0: i32) -> (i32, i32, i32) {
    %c0_i32 = arith.constant 0 : i32
    %c0_i32_0 = arith.constant 0 : i32
    %c0_i32_1 = arith.constant 0 : i32
    return %c0_i32, %arg0, %c0_i32_0 : i32, i32, i32
  }
  func.func @transform_1(%arg0: i32) -> (i32, i32, i32) {
    %c0_i32 = arith.constant 0 : i32
    %c0_i32_0 = arith.constant 0 : i32
    %c0_i32_1 = arith.constant 0 : i32
    return %c0_i32, %arg0, %c0_i32_0 : i32, i32, i32
  }
  func.func @transform_2(%arg0: i32) -> (i32, i32, i32) {
    %c0_i32 = arith.constant 0 : i32
    %c0_i32_0 = arith.constant 0 : i32
    %c0_i32_1 = arith.constant 0 : i32
    return %c0_i32, %arg0, %c0_i32_0 : i32, i32, i32
  }
}

</mosaic_0001>

<llo_original>
// kernel: tpu_custom_call.1
$region0: #{tpu_custom_call.1}
  #allocation0 [shape = 'u32[]', space=smem, size = 0x4, offset = 0x4, fixed_abs, tag = 'smem constant byte address 0x4 - core index']
  #allocation1 [shape = 'u32[144,128]{1,0:T(1,128)}', space=vmem, size = 0x12000, scoped, tag = 'internal scratch']
  %s0 = inlined_call_operand.hbm [shape: f32[4,16,16], index: 0, kind: input, shape index: {}]
  %s1 = inlined_call_operand.hbm [shape: f32[5,16,16], index: 1, kind: output, shape index: {0}]
  %s2 = inlined_call_operand.hbm [shape: s8[4,16,16], index: 2, kind: output, shape index: {1}]
  %3 = xla_tuple %s1, %s2
  %s4 = sld [smem:[#allocation0]]
  $region26: #{tpu_custom_call.1} parent=0
    _
  %s6 = ssub.s32 1, %s4
  %s7 = scalar_select 0, %s6, %s4
  $region1: #{tpu_custom_call.1} parent=0
    #allocation2 [shape = 'u8[32768]{0}', space=vmem, size = 0x8000, scoped, tag = 'input window, operand 0, single buffered']
    #allocation3 [shape = 's32[1]{0}', space=sflag, size = 0x4, scoped, tag = 'scoped memory for tpu_custom_call.1']
    #allocation4 [shape = 's32[1]{0}', space=sflag, size = 0x4, scoped, tag = 'scoped memory for tpu_custom_call.1']
    #allocation5 [shape = 'u8[40960]{0}', space=vmem, size = 0xa000, scoped, tag = 'output window, operand 0, single buffered']
    #allocation6 [shape = 'u8[8192]{0}', space=vmem, size = 0x2000, scoped, tag = 'output window, operand 1, single buffered']
    #allocation7 [shape = 's32[1]{0}', space=sflag, size = 0x4, scoped, tag = 'scoped memory for tpu_custom_call.1']
    %8 = vsyncpa [#allocation3], 0
    %9 = vsyncpa [#allocation4], 0
    %10 = vsyncpa [#allocation7], 0
    // Predicated region
    $region2: #{tpu_custom_call.1} parent=1 // pred_check
      _
    $region3: #{tpu_custom_call.1} parent=1 // pred_check_branch
      %12 = sbr.rel (0) target = $region5
    $region4: #{tpu_custom_call.1} parent=1 // pred_region
      %s14 = ssub.s32 1024, 1024
      %15 = vsyncadd [#allocation3], %s14
      %s16 = sshll.u32 [#allocation2], 4
      %s17 = int_to_ptr.vmem [resolvable:$true] %s16
      %22 = dma.hbm_to_vmem [thread:$0]  %s0, 1024, %s17, [#allocation3], 128, 128, 8
    $region5: #{tpu_custom_call.1} parent=1 // pred_fallthru
      _
    // Predicated region
    $region6: #{tpu_custom_call.1} parent=1 // pred_check
      _
    $region7: #{tpu_custom_call.1} parent=1 // pred_check_branch
      %24 = sbr.rel (0) target = $region9
    $region8: #{tpu_custom_call.1} parent=1 // pred_region
      %25 = dma.done [#allocation3], 1024
    $region9: #{tpu_custom_call.1} parent=1 // pred_fallthru
      _
    %v28 = vld [vmem:[#allocation2] sm:$0xff]
    %v29 = vld [vmem:[#allocation2 + $0x8] sm:$0xff]
    %v30 = vsub.f32 1.0, %v28
    %v31 = vsub.f32 1.0, %v29
    %v32 = vmax.f32 %v30, 1e-07
    %v33 = vmax.f32 %v31, 1e-07
    %v34 = vmin.f32 %v32, 0.9999999
    %v35 = vmin.f32 %v33, 0.9999999
    %v36 = vsub.f32 1.0, %v34
    %v37 = vsub.f32 1.0, %v35
    %v38 = vrcp.pop %v34
    %v39 = vrcp.pop %v35
    %v40 = vmul.f32 %v34, %v38
    %v41 = vmul.f32 %v35, %v39
    %v42 = vsub.f32 2.0, %v40
    %v43 = vsub.f32 2.0, %v41
    %v44 = vmul.f32 %v38, %v42
    %v45 = vmul.f32 %v39, %v43
    %v46 = vmul.f32 %v36, %v44
    %v47 = vmul.f32 %v37, %v45
    %s48 = scalar_lea.vmem [#allocation5], 16
    %vm49 = vcmask 130048
    %50 = vst.msk [vmem:[%s48] sm:$0xff] %vm49, %v46
    %51 = vst.msk [vmem:[%s48 + $0x8] sm:$0xff] %vm49, %v47
    %s52 = scalar_lea.vmem [#allocation2], 16
    %v53 = vld [vmem:[%s52] sm:$0xff]
    %v54 = vld [vmem:[%s52 + $0x8] sm:$0xff]
    %v55 = vsub.f32 1.0, %v53
    %v56 = vsub.f32 1.0, %v54
    %v57 = vmul.f32 %v30, %v55
    %v58 = vmul.f32 %v31, %v56
    %v59 = vmax.f32 %v55, 1e-07
    %v60 = vmax.f32 %v56, 1e-07
    %v61 = vmin.f32 %v59, 0.9999999
    %v62 = vmin.f32 %v60, 0.9999999
    %v63 = vsub.f32 1.0, %v61
    %v64 = vsub.f32 1.0, %v62
    %v65 = vrcp.pop %v61
    %v66 = vrcp.pop %v62
    %v67 = vmul.f32 %v61, %v65
    %v68 = vmul.f32 %v62, %v66
    %v69 = vsub.f32 2.0, %v67
    %v70 = vsub.f32 2.0, %v68
    %v71 = vmul.f32 %v65, %v69
    %v72 = vmul.f32 %v66, %v70
    %v73 = vmul.f32 %v63, %v71
    %v74 = vmul.f32 %v64, %v72
    %s75 = scalar_lea.vmem [#allocation5], 32
    %76 = vst.msk [vmem:[%s75] sm:$0xff] %vm49, %v73
    %77 = vst.msk [vmem:[%s75 + $0x8] sm:$0xff] %vm49, %v74
    %v78 = vadd.f32 %v46, %v73
    %v79 = vadd.f32 %v47, %v74
    %s80 = scalar_lea.vmem [#allocation2], 32
    %v81 = vld [vmem:[%s80] sm:$0xff]
    %v82 = vld [vmem:[%s80 + $0x8] sm:$0xff]
    %v83 = vsub.f32 1.0, %v81
    %v84 = vsub.f32 1.0, %v82
    %v85 = vmul.f32 %v57, %v83
    %v86 = vmul.f32 %v58, %v84
    %v87 = vmax.f32 %v83, 1e-07
    %v88 = vmax.f32 %v84, 1e-07
    %v89 = vmin.f32 %v87, 0.9999999
    %v90 = vmin.f32 %v88, 0.9999999
    %v91 = vsub.f32 1.0, %v89
    %v92 = vsub.f32 1.0, %v90
    %v93 = vrcp.pop %v89
    %v94 = vrcp.pop %v90
    %v95 = vmul.f32 %v89, %v93
    %v96 = vmul.f32 %v90, %v94
    %v97 = vsub.f32 2.0, %v95
    %v98 = vsub.f32 2.0, %v96
    %v99 = vmul.f32 %v93, %v97
    %v100 = vmul.f32 %v94, %v98
    %v101 = vmul.f32 %v91, %v99
    %v102 = vmul.f32 %v92, %v100
    %s103 = scalar_lea.vmem [#allocation5], 48
    %104 = vst.msk [vmem:[%s103] sm:$0xff] %vm49, %v101
    %105 = vst.msk [vmem:[%s103 + $0x8] sm:$0xff] %vm49, %v102
    %v106 = vadd.f32 %v78, %v101
    %v107 = vadd.f32 %v79, %v102
    %s108 = scalar_lea.vmem [#allocation2], 48
    %v109 = vld [vmem:[%s108] sm:$0xff]
    %v110 = vld [vmem:[%s108 + $0x8] sm:$0xff]
    %v111 = vsub.f32 1.0, %v109
    %v112 = vsub.f32 1.0, %v110
    %v113 = vmul.f32 %v85, %v111
    %v114 = vmul.f32 %v86, %v112
    %v115 = vmax.f32 %v111, 1e-07
    %v116 = vmax.f32 %v112, 1e-07
    %v117 = vmin.f32 %v115, 0.9999999
    %v118 = vmin.f32 %v116, 0.9999999
    %v119 = vsub.f32 1.0, %v117
    %v120 = vsub.f32 1.0, %v118
    %v121 = vrcp.pop %v117
    %v122 = vrcp.pop %v118
    %v123 = vmul.f32 %v117, %v121
    %v124 = vmul.f32 %v118, %v122
    %v125 = vsub.f32 2.0, %v123
    %v126 = vsub.f32 2.0, %v124
    %v127 = vmul.f32 %v121, %v125
    %v128 = vmul.f32 %v122, %v126
    %v129 = vmul.f32 %v119, %v127
    %v130 = vmul.f32 %v120, %v128
    %s131 = scalar_lea.vmem [#allocation5], 64
    %132 = vst.msk [vmem:[%s131] sm:$0xff] %vm49, %v129
    %133 = vst.msk [vmem:[%s131 + $0x8] sm:$0xff] %vm49, %v130
    %v134 = vadd.f32 %v106, %v129
    %v135 = vadd.f32 %v107, %v130
    %v136 = vmax.f32 %v113, 1e-07
    %v137 = vmax.f32 %v114, 1e-07
    %v138 = vmin.f32 %v136, 0.9999999
    %v139 = vmin.f32 %v137, 0.9999999
    %v140 = vsub.f32 1.0, %v138
    %v141 = vsub.f32 1.0, %v139
    %v142 = vrcp.pop %v140
    %v143 = vrcp.pop %v141
    %v144 = vmul.f32 %v140, %v142
    %v145 = vmul.f32 %v141, %v143
    %v146 = vsub.f32 2.0, %v144
    %v147 = vsub.f32 2.0, %v145
    %v148 = vmul.f32 %v142, %v146
    %v149 = vmul.f32 %v143, %v147
    %v150 = vmul.f32 %v138, %v148
    %v151 = vmul.f32 %v139, %v149
    %v152 = vadd.f32 %v150, %v134
    %v153 = vadd.f32 %v151, %v135
    %v154 = vrcp.pop %v152
    %v155 = vrcp.pop %v153
    %v156 = vmul.f32 %v152, %v154
    %v157 = vmul.f32 %v153, %v155
    %v158 = vsub.f32 2.0, %v156
    %v159 = vsub.f32 2.0, %v157
    %v160 = vmul.f32 %v154, %v158
    %v161 = vmul.f32 %v155, %v159
    %v162 = vmul.f32 %v150, %v160
    %v163 = vmul.f32 %v151, %v161
    %164 = vst.msk [vmem:[#allocation5] sm:$0xff] %vm49, %v162
    %165 = vst.msk [vmem:[#allocation5 + $0x8] sm:$0xff] %vm49, %v163
    %v166 = vld [vmem:[%s48] sm:$0xff]
    %v167 = vld [vmem:[%s48 + $0x8] sm:$0xff]
    %v168 = vmul.f32 %v166, %v160
    %v169 = vmul.f32 %v167, %v161
    %170 = vst.msk [vmem:[%s48] sm:$0xff] %vm49, %v168
    %171 = vst.msk [vmem:[%s48 + $0x8] sm:$0xff] %vm49, %v169
    %vm172 = vcmp.gt.f32.partialorder %v166, %v150
    %vm173 = vcmp.gt.f32.partialorder %v167, %v151
    %v174 = vsel %vm172, %v166, %v150
    %v175 = vsel %vm173, %v167, %v151
    %v176 = vsel %vm172, 1, 0
    %v177 = vsel %vm173, 1, 0
    %v178 = vld [vmem:[%s75] sm:$0xff]
    %v179 = vld [vmem:[%s75 + $0x8] sm:$0xff]
    %v180 = vmul.f32 %v178, %v160
    %v181 = vmul.f32 %v179, %v161
    %182 = vst.msk [vmem:[%s75] sm:$0xff] %vm49, %v180
    %183 = vst.msk [vmem:[%s75 + $0x8] sm:$0xff] %vm49, %v181
    %vm184 = vcmp.gt.f32.partialorder %v178, %v174
    %vm185 = vcmp.gt.f32.partialorder %v179, %v175
    %v186 = vsel %vm184, %v178, %v174
    %v187 = vsel %vm185, %v179, %v175
    %v188 = vsel %vm184, 2, %v176
    %v189 = vsel %vm185, 2, %v177
    %v190 = vld [vmem:[%s103] sm:$0xff]
    %v191 = vld [vmem:[%s103 + $0x8] sm:$0xff]
    %v192 = vmul.f32 %v190, %v160
    %v193 = vmul.f32 %v191, %v161
    %194 = vst.msk [vmem:[%s103] sm:$0xff] %vm49, %v192
    %195 = vst.msk [vmem:[%s103 + $0x8] sm:$0xff] %vm49, %v193
    %vm196 = vcmp.gt.f32.partialorder %v190, %v186
    %vm197 = vcmp.gt.f32.partialorder %v191, %v187
    %v198 = vsel %vm196, %v190, %v186
    %v199 = vsel %vm197, %v191, %v187
    %v200 = vsel %vm196, 3, %v188
    %v201 = vsel %vm197, 3, %v189
    %v202 = vld [vmem:[%s131] sm:$0xff]
    %v203 = vld [vmem:[%s131 + $0x8] sm:$0xff]
    %v204 = vmul.f32 %v202, %v160
    %v205 = vmul.f32 %v203, %v161
    %206 = vst.msk [vmem:[%s131] sm:$0xff] %vm49, %v204
    %207 = vst.msk [vmem:[%s131 + $0x8] sm:$0xff] %vm49, %v205
    %vm208 = vcmp.gt.f32.partialorder %v202, %v198
    %vm209 = vcmp.gt.f32.partialorder %v203, %v199
    %v210 = vsel %vm208, 4, %v200
    %v211 = vsel %vm209, 4, %v201
    %vm212 = vcmp.eq.s32.totalorder %v210, 1
    %vm213 = vcmp.eq.s32.totalorder %v211, 1
    %vm214 = vmpackc.low %vm213, %vm212
    %vm215 = vmpackc.even %vm214, %vm214
    %v216 = vsel %vm215, 16843009, 0
    %v217 = vunpack.c.0.s8 %v216
    %v218 = vunpack.c.1.s8 %v216
    %v219 = vpack.c.b16 %v217, %v217
    %v220 = vpack.c.b8 %v219, %v219
    %v221 = vpack.c.b16 %v218, %v218
    %v222 = vpack.c.b8 %v221, %v221
    %vm223 = vcmask 123904
    %224 = vst.msk [vmem:[#allocation6] sm:$0x3] %vm223, %v220
    %225 = vst.msk [vmem:[#allocation6 + $0x2] sm:$0x3] %vm223, %v222
    %vm226 = vcmp.eq.s32.totalorder %v210, 2
    %vm227 = vcmp.eq.s32.totalorder %v211, 2
    %vm228 = vmpackc.low %vm227, %vm226
    %vm229 = vmpackc.even %vm228, %vm228
    %v230 = vsel %vm229, 16843009, 0
    %v231 = vunpack.c.0.s8 %v230
    %v232 = vunpack.c.1.s8 %v230
    %v233 = vpack.c.b16 %v231, %v231
    %v234 = vpack.c.b8 %v233, %v233
    %v235 = vpack.c.b16 %v232, %v232
    %v236 = vpack.c.b8 %v235, %v235
    %s237 = scalar_lea.vmem [#allocation6], 4
    %238 = vst.msk [vmem:[%s237] sm:$0x3] %vm223, %v234
    %239 = vst.msk [vmem:[%s237 + $0x2] sm:$0x3] %vm223, %v236
    %vm240 = vcmp.eq.s32.totalorder %v210, 3
    %vm241 = vcmp.eq.s32.totalorder %v211, 3
    %vm242 = vmpackc.low %vm241, %vm240
    %vm243 = vmpackc.even %vm242, %vm242
    %v244 = vsel %vm243, 16843009, 0
    %v245 = vunpack.c.0.s8 %v244
    %v246 = vunpack.c.1.s8 %v244
    %v247 = vpack.c.b16 %v245, %v245
    %v248 = vpack.c.b8 %v247, %v247
    %v249 = vpack.c.b16 %v246, %v246
    %v250 = vpack.c.b8 %v249, %v249
    %s251 = scalar_lea.vmem [#allocation6], 8
    %252 = vst.msk [vmem:[%s251] sm:$0x3] %vm223, %v248
    %253 = vst.msk [vmem:[%s251 + $0x2] sm:$0x3] %vm223, %v250
    %vm254 = vcmp.eq.s32.totalorder %v210, 4
    %vm255 = vcmp.eq.s32.totalorder %v211, 4
    %vm256 = vmpackc.low %vm255, %vm254
    %vm257 = vmpackc.even %vm256, %vm256
    %v258 = vsel %vm257, 16843009, 0
    %v259 = vunpack.c.0.s8 %v258
    %v260 = vunpack.c.1.s8 %v258
    %v261 = vpack.c.b16 %v259, %v259
    %v262 = vpack.c.b8 %v261, %v261
    %v263 = vpack.c.b16 %v260, %v260
    %v264 = vpack.c.b8 %v263, %v263
    %s265 = scalar_lea.vmem [#allocation6], 12
    %266 = vst.msk [vmem:[%s265] sm:$0x3] %vm223, %v262
    %267 = vst.msk [vmem:[%s265 + $0x2] sm:$0x3] %vm223, %v264
    // Predicated region
    $region10: #{tpu_custom_call.1} parent=1 // pred_check
      _
    $region11: #{tpu_custom_call.1} parent=1 // pred_check_branch
      %269 = sbr.rel (0) target = $region13
    $region12: #{tpu_custom_call.1} parent=1 // pred_region
      %s271 = ssub.s32 1280, 1280
      %272 = vsyncadd [#allocation4], %s271
      %s273 = sshll.u32 [#allocation5], 4
      %s274 = int_to_ptr.vmem [resolvable:$true] %s273
      %279 = dma.vmem_to_hbm [thread:$0]  %s274, 1280, %s1, [#allocation4], 128, 128, 8
    $region13: #{tpu_custom_call.1} parent=1 // pred_fallthru
      _
    // Predicated region
    $region14: #{tpu_custom_call.1} parent=1 // pred_check
      _
    $region15: #{tpu_custom_call.1} parent=1 // pred_check_branch
      %281 = sbr.rel (0) target = $region17
    $region16: #{tpu_custom_call.1} parent=1 // pred_region
      %s283 = ssub.s32 256, 256
      %284 = vsyncadd [#allocation7], %s283
      %s285 = sshll.u32 [#allocation6], 4
      %s286 = int_to_ptr.vmem [resolvable:$true] %s285
      %291 = dma.vmem_to_hbm [thread:$0]  %s286, 256, %s2, [#allocation7], 32, 32, 2
    $region17: #{tpu_custom_call.1} parent=1 // pred_fallthru
      _
    // Predicated region
    $region18: #{tpu_custom_call.1} parent=1 // pred_check
      _
    $region19: #{tpu_custom_call.1} parent=1 // pred_check_branch
      %293 = sbr.rel (0) target = $region21
    $region20: #{tpu_custom_call.1} parent=1 // pred_region
      %294 = dma.done [#allocation4], 1280
    $region21: #{tpu_custom_call.1} parent=1 // pred_fallthru
      _
    // Predicated region
    $region22: #{tpu_custom_call.1} parent=1 // pred_check
      _
    $region23: #{tpu_custom_call.1} parent=1 // pred_check_branch
      %296 = sbr.rel (0) target = $region25
    $region24: #{tpu_custom_call.1} parent=1 // pred_region
      %297 = dma.done [#allocation7], 256
    $region25: #{tpu_custom_call.1} parent=1 // pred_fallthru
      _
    %298 = vsyncpa [#allocation3], 1
    %299 = vsyncpa [#allocation4], 1
    %300 = vsyncpa [#allocation7], 1

</llo_original>
